<compile_context>
chip_gen: v7x
topology: tpu7x:2x2x1
jax: 0.10.0
libtpu: 0.0.40
codegen_flags: <defaults>
</compile_context>

<pallas_src>
import jax
import jax.numpy as jnp
from jax.experimental import pallas as pl
from jax.experimental.pallas import tpu as pltpu


def _mlp_kernel(x_ref, w1_ref, b1_ref, w2_ref, b2_ref, w3_ref, b3_ref, o_ref):
    x = x_ref[...].astype(jnp.float32)
    # Layer 1: Linear + ReLU
    h1 = jnp.dot(x, w1_ref[...], preferred_element_type=jnp.float32) + b1_ref[...]
    h1 = jnp.maximum(h1, 0.0)
    # Layer 2: Linear + ReLU
    h2 = jnp.dot(h1, w2_ref[...], preferred_element_type=jnp.float32) + b2_ref[...]
    h2 = jnp.maximum(h2, 0.0)
    # Layer 3: Linear (no activation)
    y = jnp.dot(h2, w3_ref[...], preferred_element_type=jnp.float32) + b3_ref[...]
    o_ref[...] = y.astype(o_ref.dtype)


def _round_up(x, m):
    return ((x + m - 1) // m) * m


def embed_social_features(ftr_list, params, *, tile_rows=1024):
    """Applies the EmbedSocialFeatures MLP to ftr_list[..., input_size]."""
    w1, b1, w2, b2, w3, b3 = params
    input_size = w1.shape[0]
    hidden_size = w3.shape[1]

    orig_shape = ftr_list.shape
    assert orig_shape[-1] == input_size
    x2d = ftr_list.reshape(-1, input_size)
    rows = x2d.shape[0]

    # Row tile: as large as requested but no larger than the data needs,
    # kept a multiple of 8 (sublane granularity).  No input padding — Pallas
    # handles the ragged last block (reads past the end are don't-care rows,
    # output writes are clipped to the true array extent).
    tile = min(tile_rows, _round_up(rows, 8))
    tile = max(8, _round_up(tile, 8))
    grid = (pl.cdiv(rows, tile),)

    # Weights/biases are tiny; pass the full arrays as single resident blocks.
    full = lambda arr: pl.BlockSpec(arr.shape, lambda i: (0,) * arr.ndim)

    out = pl.pallas_call(
        _mlp_kernel,
        out_shape=jax.ShapeDtypeStruct((rows, hidden_size), ftr_list.dtype),
        grid_spec=pltpu.PrefetchScalarGridSpec(
            num_scalar_prefetch=0,
            grid=grid,
            in_specs=[
                pl.BlockSpec((tile, input_size), lambda i: (i, 0)),
                full(w1), full(b1), full(w2), full(b2), full(w3), full(b3),
            ],
            out_specs=pl.BlockSpec((tile, hidden_size), lambda i: (i, 0)),
        ),
        compiler_params=pltpu.CompilerParams(
            dimension_semantics=("parallel",),
            vmem_limit_bytes=32 * 1024 * 1024,
        ),
    )(x2d, w1, b1, w2, b2, w3, b3)

    return out.reshape(*orig_shape[:-1], hidden_size)


def init_params(key, input_size, hidden_size, dtype=jnp.float32):
    """Deterministic synthetic parameters matching nn.Linear shapes.

    PyTorch stores Linear weight as (out, in); we store (in, out) so the
    kernel computes x @ W + b (equivalent to x @ W_pt.T + b)."""
    ks = jax.random.split(key, 6)
    dims = [(input_size, 32), (32, 64), (64, hidden_size)]
    params = []
    for li, (din, dout) in enumerate(dims):
        bound = 1.0 / jnp.sqrt(din)
        w = jax.random.uniform(ks[2 * li], (din, dout), dtype, -bound, bound)
        b = jax.random.uniform(ks[2 * li + 1], (1, dout), dtype, -bound, bound)
        params += [w, b]
    return tuple(params)


def _reference(ftr_list, params):
    w1, b1, w2, b2, w3, b3 = params
    h1 = jnp.maximum(ftr_list @ w1 + b1[0], 0.0)
    h2 = jnp.maximum(h1 @ w2 + b2[0], 0.0)
    return h2 @ w3 + b3[0]


if __name__ == "__main__":
    input_size = 16
    hidden_size = 32

    key = jax.random.PRNGKey(0)
    kx, kp, kx2 = jax.random.split(key, 3)
    params = init_params(kp, input_size, hidden_size)

    # Small demo shape consistent with the module: (batch, agents, input_size).
    batch, n_agents = 2, 8
    ftr_list = jax.random.normal(kx, (batch, n_agents, input_size), jnp.float32)
    out = jax.block_until_ready(embed_social_features(ftr_list, params))
    ref = _reference(ftr_list, params)
    assert out.shape == (batch, n_agents, hidden_size), out.shape
    assert jnp.allclose(out, ref, atol=1e-5, rtol=1e-5), float(
        jnp.max(jnp.abs(out - ref)))

    # Ragged case: rows (3*7=21) not a multiple of the row tile or of 8,
    # exercising the no-pad / clipped-write path.
    ftr2 = jax.random.normal(kx2, (3, 7, input_size), jnp.float32)
    out2 = jax.block_until_ready(
        embed_social_features(ftr2, params, tile_rows=16))
    ref2 = _reference(ftr2, params)
    assert out2.shape == (3, 7, hidden_size), out2.shape
    assert jnp.allclose(out2, ref2, atol=1e-5, rtol=1e-5), float(
        jnp.max(jnp.abs(out2 - ref2)))

    print("KERNEL_OK")
</pallas_src>

<mosaic_0001>
module attributes {stable_mosaic.version = 11 : i64} {
  func.func @_mlp_kernel(%arg0: i32, %arg1: memref<16x16xf32, #tpu.memory_space<vmem>>, %arg2: memref<16x32xf32, #tpu.memory_space<vmem>>, %arg3: memref<1x32xf32, #tpu.memory_space<vmem>>, %arg4: memref<32x64xf32, #tpu.memory_space<vmem>>, %arg5: memref<1x64xf32, #tpu.memory_space<vmem>>, %arg6: memref<64x32xf32, #tpu.memory_space<vmem>>, %arg7: memref<1x32xf32, #tpu.memory_space<vmem>>, %arg8: memref<16x32xf32, #tpu.memory_space<vmem>>) attributes {dimension_semantics = [#tpu.dimension_semantics<parallel>], iteration_bounds = array<i64: 1>, scalar_prefetch = 0 : i64, scratch_operands = 0 : i64, tpu.core_type = #tpu.core_type<tc>, window_params = [{transform_indices = @transform_0, window_bounds = array<i64: 16, 16>}, {pipeline_mode = #tpu.pipeline_mode<synchronous>, transform_indices = @transform_1, window_bounds = array<i64: 16, 32>}, {pipeline_mode = #tpu.pipeline_mode<synchronous>, transform_indices = @transform_2, window_bounds = array<i64: 1, 32>}, {pipeline_mode = #tpu.pipeline_mode<synchronous>, transform_indices = @transform_3, window_bounds = array<i64: 32, 64>}, {pipeline_mode = #tpu.pipeline_mode<synchronous>, transform_indices = @transform_4, window_bounds = array<i64: 1, 64>}, {pipeline_mode = #tpu.pipeline_mode<synchronous>, transform_indices = @transform_5, window_bounds = array<i64: 64, 32>}, {pipeline_mode = #tpu.pipeline_mode<synchronous>, transform_indices = @transform_6, window_bounds = array<i64: 1, 32>}, {transform_indices = @transform_7, window_bounds = array<i64: 16, 32>}]} {
    %c0 = arith.constant 0 : index
    %c0_0 = arith.constant 0 : index
    %0 = vector.load %arg1[%c0, %c0_0] : memref<16x16xf32, #tpu.memory_space<vmem>>, vector<16x16xf32>
    %c0_1 = arith.constant 0 : index
    %c0_2 = arith.constant 0 : index
    %1 = vector.load %arg2[%c0_1, %c0_2] : memref<16x32xf32, #tpu.memory_space<vmem>>, vector<16x32xf32>
    %cst = arith.constant dense<0.000000e+00> : vector<16x32xf32>
    %2 = tpu.matmul %0, %1, %cst {dimension_numbers = #tpu.dot_dimension_numbers<[1], [0], [0], [1], [0, 0, 1, 1], [], []>} : vector<16x16xf32>, vector<16x32xf32>, vector<16x32xf32> -> vector<16x32xf32>
    %c0_3 = arith.constant 0 : index
    %c0_4 = arith.constant 0 : index
    %3 = vector.load %arg3[%c0_3, %c0_4] : memref<1x32xf32, #tpu.memory_space<vmem>>, vector<1x32xf32>
    %4 = vector.broadcast %3 : vector<1x32xf32> to vector<16x32xf32>
    %5 = arith.addf %2, %4 : vector<16x32xf32>
    %cst_5 = arith.constant 0.000000e+00 : f32
    %6 = vector.broadcast %cst_5 : f32 to vector<16x32xf32>
    %7 = arith.maximumf %5, %6 : vector<16x32xf32>
    %c0_6 = arith.constant 0 : index
    %c0_7 = arith.constant 0 : index
    %8 = vector.load %arg4[%c0_6, %c0_7] : memref<32x64xf32, #tpu.memory_space<vmem>>, vector<32x64xf32>
    %cst_8 = arith.constant dense<0.000000e+00> : vector<16x64xf32>
    %9 = tpu.matmul %7, %8, %cst_8 {dimension_numbers = #tpu.dot_dimension_numbers<[1], [0], [0], [1], [0, 0, 1, 1], [], []>} : vector<16x32xf32>, vector<32x64xf32>, vector<16x64xf32> -> vector<16x64xf32>
    %c0_9 = arith.constant 0 : index
    %c0_10 = arith.constant 0 : index
    %10 = vector.load %arg5[%c0_9, %c0_10] : memref<1x64xf32, #tpu.memory_space<vmem>>, vector<1x64xf32>
    %11 = vector.broadcast %10 : vector<1x64xf32> to vector<16x64xf32>
    %12 = arith.addf %9, %11 : vector<16x64xf32>
    %cst_11 = arith.constant 0.000000e+00 : f32
    %13 = vector.broadcast %cst_11 : f32 to vector<16x64xf32>
    %14 = arith.maximumf %12, %13 : vector<16x64xf32>
    %c0_12 = arith.constant 0 : index
    %c0_13 = arith.constant 0 : index
    %15 = vector.load %arg6[%c0_12, %c0_13] : memref<64x32xf32, #tpu.memory_space<vmem>>, vector<64x32xf32>
    %cst_14 = arith.constant dense<0.000000e+00> : vector<16x32xf32>
    %16 = tpu.matmul %14, %15, %cst_14 {dimension_numbers = #tpu.dot_dimension_numbers<[1], [0], [0], [1], [0, 0, 1, 1], [], []>} : vector<16x64xf32>, vector<64x32xf32>, vector<16x32xf32> -> vector<16x32xf32>
    %c0_15 = arith.constant 0 : index
    %c0_16 = arith.constant 0 : index
    %17 = vector.load %arg7[%c0_15, %c0_16] : memref<1x32xf32, #tpu.memory_space<vmem>>, vector<1x32xf32>
    %18 = vector.broadcast %17 : vector<1x32xf32> to vector<16x32xf32>
    %19 = arith.addf %16, %18 : vector<16x32xf32>
    %c0_17 = arith.constant 0 : index
    %c0_18 = arith.constant 0 : index
    %20 = vector.load %arg8[%c0_17, %c0_18] : memref<16x32xf32, #tpu.memory_space<vmem>>, vector<16x32xf32>
    tpu.vector_store %arg8[%c0_17, %c0_18], %19 {strides = array<i32>} : memref<16x32xf32, #tpu.memory_space<vmem>>, vector<16x32xf32>,
    return
  }
  func.func @transform_0(%arg0: i32) -> (i32, i32) {
    %c0_i32 = arith.constant 0 : i32
    %c0_i32_0 = arith.constant 0 : i32
    return %arg0, %c0_i32 : i32, i32
  }
  func.func @transform_1(%arg0: i32) -> (i32, i32) {
    %c0_i32 = arith.constant 0 : i32
    %c0_i32_0 = arith.constant 0 : i32
    %c0_i32_1 = arith.constant 0 : i32
    return %c0_i32, %c0_i32_0 : i32, i32
  }
  func.func @transform_2(%arg0: i32) -> (i32, i32) {
    %c0_i32 = arith.constant 0 : i32
    %c0_i32_0 = arith.constant 0 : i32
    %c0_i32_1 = arith.constant 0 : i32
    return %c0_i32, %c0_i32_0 : i32, i32
  }
  func.func @transform_3(%arg0: i32) -> (i32, i32) {
    %c0_i32 = arith.constant 0 : i32
    %c0_i32_0 = arith.constant 0 : i32
    %c0_i32_1 = arith.constant 0 : i32
    return %c0_i32, %c0_i32_0 : i32, i32
  }
  func.func @transform_4(%arg0: i32) -> (i32, i32) {
    %c0_i32 = arith.constant 0 : i32
    %c0_i32_0 = arith.constant 0 : i32
    %c0_i32_1 = arith.constant 0 : i32
    return %c0_i32, %c0_i32_0 : i32, i32
  }
  func.func @transform_5(%arg0: i32) -> (i32, i32) {
    %c0_i32 = arith.constant 0 : i32
    %c0_i32_0 = arith.constant 0 : i32
    %c0_i32_1 = arith.constant 0 : i32
    return %c0_i32, %c0_i32_0 : i32, i32
  }
  func.func @transform_6(%arg0: i32) -> (i32, i32) {
    %c0_i32 = arith.constant 0 : i32
    %c0_i32_0 = arith.constant 0 : i32
    %c0_i32_1 = arith.constant 0 : i32
    return %c0_i32, %c0_i32_0 : i32, i32
  }
  func.func @transform_7(%arg0: i32) -> (i32, i32) {
    %c0_i32 = arith.constant 0 : i32
    %c0_i32_0 = arith.constant 0 : i32
    return %arg0, %c0_i32 : i32, i32
  }
}

</mosaic_0001>

<llo_original>
// kernel: tpu_custom_call.1
$region0: #{tpu_custom_call.1}
  #allocation0 [shape = 'u32[]', space=smem, size = 0x4, offset = 0x4, fixed_abs, tag = 'smem constant byte address 0x4 - core index']
  #allocation1 [shape = 'u32[144,128]{1,0:T(1,128)}', space=vmem, size = 0x12000, scoped, tag = 'internal scratch']
  %s0 = inlined_call_operand.vmem [shape: f32[16,16], index: 0, kind: input, shape index: {}]
  %s1 = inlined_call_operand.vmem [shape: f32[16,32], index: 1, kind: input, shape index: {}]
  %s2 = inlined_call_operand.vmem [shape: f32[1,32], index: 2, kind: input, shape index: {}]
  %s3 = inlined_call_operand.vmem [shape: f32[32,64], index: 3, kind: input, shape index: {}]
  %s4 = inlined_call_operand.vmem [shape: f32[1,64], index: 4, kind: input, shape index: {}]
  %s5 = inlined_call_operand.vmem [shape: f32[64,32], index: 5, kind: input, shape index: {}]
  %s6 = inlined_call_operand.vmem [shape: f32[1,32], index: 6, kind: input, shape index: {}]
  %s7 = inlined_call_operand.hbm [shape: f32[16,32], index: 7, kind: output, shape index: {}]
  %s8 = sld [smem:[#allocation0]]
  $region38: #{tpu_custom_call.1} parent=0
    _
  %s10 = ssub.s32 1, %s8
  %s11 = scalar_select 0, %s10, %s8
  $region1: #{tpu_custom_call.1} parent=0
    #allocation2 [shape = 'u8[8192]{0}', space=vmem, size = 0x2000, scoped, tag = 'output window, operand 0, single buffered']
    #allocation3 [shape = 's32[1]{0}', space=sflag, size = 0x4, scoped, tag = 'scoped memory for tpu_custom_call.1']
    %12 = vsyncpa [#allocation3], 0
    // Predicated region
    $region2: #{tpu_custom_call.1} parent=1 // pred_check
      _
    $region3: #{tpu_custom_call.1} parent=1 // pred_check_branch
      %14 = sbr.rel (0) target = $region5
    $region4: #{tpu_custom_call.1} parent=1 // pred_region
      _
    $region5: #{tpu_custom_call.1} parent=1 // pred_fallthru
      _
    // Predicated region
    $region6: #{tpu_custom_call.1} parent=1 // pred_check
      _
    $region7: #{tpu_custom_call.1} parent=1 // pred_check_branch
      %16 = sbr.rel (0) target = $region9
    $region8: #{tpu_custom_call.1} parent=1 // pred_region
      _
    $region9: #{tpu_custom_call.1} parent=1 // pred_fallthru
      _
    // Predicated region
    $region10: #{tpu_custom_call.1} parent=1 // pred_check
      _
    $region11: #{tpu_custom_call.1} parent=1 // pred_check_branch
      %18 = sbr.rel (0) target = $region13
    $region12: #{tpu_custom_call.1} parent=1 // pred_region
      _
    $region13: #{tpu_custom_call.1} parent=1 // pred_fallthru
      _
    // Predicated region
    $region14: #{tpu_custom_call.1} parent=1 // pred_check
      _
    $region15: #{tpu_custom_call.1} parent=1 // pred_check_branch
      %20 = sbr.rel (0) target = $region17
    $region16: #{tpu_custom_call.1} parent=1 // pred_region
      _
    $region17: #{tpu_custom_call.1} parent=1 // pred_fallthru
      _
    // Predicated region
    $region18: #{tpu_custom_call.1} parent=1 // pred_check
      _
    $region19: #{tpu_custom_call.1} parent=1 // pred_check_branch
      %22 = sbr.rel (0) target = $region21
    $region20: #{tpu_custom_call.1} parent=1 // pred_region
      _
    $region21: #{tpu_custom_call.1} parent=1 // pred_fallthru
      _
    // Predicated region
    $region22: #{tpu_custom_call.1} parent=1 // pred_check
      _
    $region23: #{tpu_custom_call.1} parent=1 // pred_check_branch
      %24 = sbr.rel (0) target = $region25
    $region24: #{tpu_custom_call.1} parent=1 // pred_region
      _
    $region25: #{tpu_custom_call.1} parent=1 // pred_fallthru
      _
    // Predicated region
    $region26: #{tpu_custom_call.1} parent=1 // pred_check
      _
    $region27: #{tpu_custom_call.1} parent=1 // pred_check_branch
      %26 = sbr.rel (0) target = $region29
    $region28: #{tpu_custom_call.1} parent=1 // pred_region
      _
    $region29: #{tpu_custom_call.1} parent=1 // pred_fallthru
      _
    %v27 = vld [vmem:[%s0] sm:$0xff]
    %v28 = vld [vmem:[%s0 + $0x8] sm:$0xff]
    %v29 = vld [vmem:[%s1] sm:$0xff]
    %v30 = vld [vmem:[%s1 + $0x8] sm:$0xff]
    %v31 = vld [vmem:[%s2] sm:$0x1]
    %v33 = vlaneseq
    %v34 = vshrl.u32 %v33, 7
    %v35 = vsub.s32 0, %v34
    %v36 = vrot.slane %v31, %v35
    %vm38 = vcmask 130048
    %v40 = vsel %vm38, %v27, 0
    %v43 = vsel %vm38, %v28, 0
    %45 = vmatprep.subr.mxu0 0.0
    %46 = vmatpush1.msra.mxu0 %v29
    %47 = vmatprep.subr.mxu0 0.0
    %48 = vmatpush1.msra.mxu0 %v30
    %49 = vmatprep.subr.mxu0 0.0
    %50 = vmatpush1.msra.mxu0 0.0
    %51 = vmatprep.subr.mxu0 0.0
    %52 = vmatpush1.msra.mxu0 0.0
    %53 = vmatprep.subr.mxu0 0.0
    %54 = vmatpush1.msra.mxu0 0.0
    %55 = vmatprep.subr.mxu0 0.0
    %56 = vmatpush1.msra.mxu0 0.0
    %57 = vmatprep.subr.mxu0 0.0
    %58 = vmatpush1.msra.mxu0 0.0
    %59 = vmatprep.subr.mxu0 0.0
    %60 = vmatpush1.msra.mxu0 0.0
    %61 = vmatprep.subr.mxu0 0.0
    %62 = vmatpush1.msra.mxu0 0.0
    %63 = vmatprep.subr.mxu0 0.0
    %64 = vmatpush1.msra.mxu0 0.0
    %65 = vmatprep.subr.mxu0 0.0
    %66 = vmatpush1.msra.mxu0 0.0
    %67 = vmatprep.subr.mxu0 0.0
    %68 = vmatpush1.msra.mxu0 0.0
    %69 = vmatprep.subr.mxu0 0.0
    %70 = vmatpush1.msra.mxu0 0.0
    %71 = vmatprep.subr.mxu0 0.0
    %72 = vmatpush1.msra.mxu0 0.0
    %73 = vmatprep.subr.mxu0 0.0
    %74 = vmatpush1.msra.mxu0 0.0
    %75 = vmatprep.subr.mxu0 0.0
    %76 = vmatpush1.msra.mxu0 0.0
    %77 = vmatprep.subr.mxu0 0.0
    %78 = vmatpush1.msra.mxu0 0.0
    %79 = vmatprep.subr.mxu0 0.0
    %80 = vmatpush1.msra.mxu0 0.0
    %81 = vmatprep.subr.mxu0 0.0
    %82 = vmatpush1.msra.mxu0 0.0
    %83 = vmatprep.subr.mxu0 0.0
    %84 = vmatpush1.msra.mxu0 0.0
    %85 = vmatprep.subr.mxu0 0.0
    %86 = vmatpush1.msra.mxu0 0.0
    %87 = vmatprep.subr.mxu0 0.0
    %88 = vmatpush1.msra.mxu0 0.0
    %89 = vmatprep.subr.mxu0 0.0
    %90 = vmatpush1.msra.mxu0 0.0
    %91 = vmatprep.subr.mxu0 0.0
    %92 = vmatpush1.msra.mxu0 0.0
    %93 = vmatprep.subr.mxu0 0.0
    %94 = vmatpush1.msra.mxu0 0.0
    %95 = vmatprep.subr.mxu0 0.0
    %96 = vmatpush1.msra.mxu0 0.0
    %97 = vmatprep.subr.mxu0 0.0
    %98 = vmatpush1.msra.mxu0 0.0
    %99 = vmatprep.subr.mxu0 0.0
    %100 = vmatpush1.msra.mxu0 0.0
    %101 = vmatprep.subr.mxu0 0.0
    %102 = vmatpush1.msra.mxu0 0.0
    %103 = vmatprep.subr.mxu0 0.0
    %104 = vmatpush1.msra.mxu0 0.0
    %105 = vmatprep.subr.mxu0 0.0
    %106 = vmatpush1.msra.mxu0 0.0
    %107 = vmatprep.subr.mxu0 0.0
    %108 = vmatpush1.msra.mxu0 0.0
    %109 = vmatprep.mubr.f32.mxu0 0.0
    %110 = vmatmul.mubr.f32.gmra.mrb[0].mxu0 %v40
    %v111 = vpop.f32.mrb[0].mxu0
    %v112 = vadd.f32 %v36, %v111
    %v113 = vpop.f32.mrb[0].mxu0
    %114 = vmatprep.mubr.f32.mxu0 0.0
    %115 = vmatmul.mubr.f32.gmra.mrb[0].mxu0 %v43
    %v116 = vpop.f32.mrb[0].mxu0
    %v117 = vadd.f32 %v36, %v116
    %v118 = vpop.f32.mrb[0].mxu0
    %119 = vdwg.mxu0
    %v120 = vmax.f32 %v112, 0.0
    %v121 = vmax.f32 %v117, 0.0
    %v122 = vld [vmem:[%s3] sm:$0xff]
    %v123 = vld [vmem:[%s3 + $0x8] sm:$0xff]
    %v124 = vld [vmem:[%s3 + $0x10] sm:$0xff]
    %v125 = vld [vmem:[%s3 + $0x18] sm:$0xff]
    %v126 = vld [vmem:[%s4] sm:$0x1]
    %v128 = vlaneseq
    %v129 = vshrl.u32 %v128, 7
    %v130 = vsub.s32 0, %v129
    %v131 = vrot.slane %v126, %v130
    %vm133 = vcmask 261120
    %v135 = vsel %vm133, %v120, 0
    %v138 = vsel %vm133, %v121, 0
    %140 = vmatprep.subr.mxu0 0.0
    %141 = vmatpush1.msra.mxu0 %v122
    %142 = vmatprep.subr.mxu0 0.0
    %143 = vmatpush1.msra.mxu0 %v123
    %144 = vmatprep.subr.mxu0 0.0
    %145 = vmatpush1.msra.mxu0 %v124
    %146 = vmatprep.subr.mxu0 0.0
    %147 = vmatpush1.msra.mxu0 %v125
    %148 = vmatprep.subr.mxu0 0.0
    %149 = vmatpush1.msra.mxu0 0.0
    %150 = vmatprep.subr.mxu0 0.0
    %151 = vmatpush1.msra.mxu0 0.0
    %152 = vmatprep.subr.mxu0 0.0
    %153 = vmatpush1.msra.mxu0 0.0
    %154 = vmatprep.subr.mxu0 0.0
    %155 = vmatpush1.msra.mxu0 0.0
    %156 = vmatprep.subr.mxu0 0.0
    %157 = vmatpush1.msra.mxu0 0.0
    %158 = vmatprep.subr.mxu0 0.0
    %159 = vmatpush1.msra.mxu0 0.0
    %160 = vmatprep.subr.mxu0 0.0
    %161 = vmatpush1.msra.mxu0 0.0
    %162 = vmatprep.subr.mxu0 0.0
    %163 = vmatpush1.msra.mxu0 0.0
    %164 = vmatprep.subr.mxu0 0.0
    %165 = vmatpush1.msra.mxu0 0.0
    %166 = vmatprep.subr.mxu0 0.0
    %167 = vmatpush1.msra.mxu0 0.0
    %168 = vmatprep.subr.mxu0 0.0
    %169 = vmatpush1.msra.mxu0 0.0
    %170 = vmatprep.subr.mxu0 0.0
    %171 = vmatpush1.msra.mxu0 0.0
    %172 = vmatprep.subr.mxu0 0.0
    %173 = vmatpush1.msra.mxu0 0.0
    %174 = vmatprep.subr.mxu0 0.0
    %175 = vmatpush1.msra.mxu0 0.0
    %176 = vmatprep.subr.mxu0 0.0
    %177 = vmatpush1.msra.mxu0 0.0
    %178 = vmatprep.subr.mxu0 0.0
    %179 = vmatpush1.msra.mxu0 0.0
    %180 = vmatprep.subr.mxu0 0.0
    %181 = vmatpush1.msra.mxu0 0.0
    %182 = vmatprep.subr.mxu0 0.0
    %183 = vmatpush1.msra.mxu0 0.0
    %184 = vmatprep.subr.mxu0 0.0
    %185 = vmatpush1.msra.mxu0 0.0
    %186 = vmatprep.subr.mxu0 0.0
    %187 = vmatpush1.msra.mxu0 0.0
    %188 = vmatprep.subr.mxu0 0.0
    %189 = vmatpush1.msra.mxu0 0.0
    %190 = vmatprep.subr.mxu0 0.0
    %191 = vmatpush1.msra.mxu0 0.0
    %192 = vmatprep.subr.mxu0 0.0
    %193 = vmatpush1.msra.mxu0 0.0
    %194 = vmatprep.subr.mxu0 0.0
    %195 = vmatpush1.msra.mxu0 0.0
    %196 = vmatprep.subr.mxu0 0.0
    %197 = vmatpush1.msra.mxu0 0.0
    %198 = vmatprep.subr.mxu0 0.0
    %199 = vmatpush1.msra.mxu0 0.0
    %200 = vmatprep.subr.mxu0 0.0
    %201 = vmatpush1.msra.mxu0 0.0
    %202 = vmatprep.subr.mxu0 0.0
    %203 = vmatpush1.msra.mxu0 0.0
    %204 = vmatprep.mubr.f32.mxu0 0.0
    %205 = vmatmul.mubr.f32.gmra.mrb[0].mxu0 %v135
    %v206 = vpop.f32.mrb[0].mxu0
    %v207 = vadd.f32 %v131, %v206
    %v208 = vpop.f32.mrb[0].mxu0
    %209 = vmatprep.mubr.f32.mxu0 0.0
    %210 = vmatmul.mubr.f32.gmra.mrb[0].mxu0 %v138
    %v211 = vpop.f32.mrb[0].mxu0
    %v212 = vadd.f32 %v131, %v211
    %v213 = vpop.f32.mrb[0].mxu0
    %214 = vdwg.mxu0
    %v215 = vmax.f32 %v207, 0.0
    %v216 = vmax.f32 %v212, 0.0
    %v217 = vld [vmem:[%s5] sm:$0xff]
    %v218 = vld [vmem:[%s5 + $0x8] sm:$0xff]
    %v219 = vld [vmem:[%s5 + $0x10] sm:$0xff]
    %v220 = vld [vmem:[%s5 + $0x18] sm:$0xff]
    %v221 = vld [vmem:[%s5 + $0x20] sm:$0xff]
    %v222 = vld [vmem:[%s5 + $0x28] sm:$0xff]
    %v223 = vld [vmem:[%s5 + $0x30] sm:$0xff]
    %v224 = vld [vmem:[%s5 + $0x38] sm:$0xff]
    %v225 = vld [vmem:[%s6] sm:$0x1]
    %v227 = vlaneseq
    %v228 = vshrl.u32 %v227, 7
    %v229 = vsub.s32 0, %v228
    %v230 = vrot.slane %v225, %v229
    %vm232 = vcmask 523264
    %v234 = vsel %vm232, %v215, 0
    %v237 = vsel %vm232, %v216, 0
    %239 = vmatprep.subr.mxu0 0.0
    %240 = vmatpush1.msra.mxu0 %v217
    %241 = vmatprep.subr.mxu0 0.0
    %242 = vmatpush1.msra.mxu0 %v218
    %243 = vmatprep.subr.mxu0 0.0
    %244 = vmatpush1.msra.mxu0 %v219
    %245 = vmatprep.subr.mxu0 0.0
    %246 = vmatpush1.msra.mxu0 %v220
    %247 = vmatprep.subr.mxu0 0.0
    %248 = vmatpush1.msra.mxu0 %v221
    %249 = vmatprep.subr.mxu0 0.0
    %250 = vmatpush1.msra.mxu0 %v222
    %251 = vmatprep.subr.mxu0 0.0
    %252 = vmatpush1.msra.mxu0 %v223
    %253 = vmatprep.subr.mxu0 0.0
    %254 = vmatpush1.msra.mxu0 %v224
    %255 = vmatprep.subr.mxu0 0.0
    %256 = vmatpush1.msra.mxu0 0.0
    %257 = vmatprep.subr.mxu0 0.0
    %258 = vmatpush1.msra.mxu0 0.0
    %259 = vmatprep.subr.mxu0 0.0
    %260 = vmatpush1.msra.mxu0 0.0
    %261 = vmatprep.subr.mxu0 0.0
    %262 = vmatpush1.msra.mxu0 0.0
    %263 = vmatprep.subr.mxu0 0.0
    %264 = vmatpush1.msra.mxu0 0.0
    %265 = vmatprep.subr.mxu0 0.0
    %266 = vmatpush1.msra.mxu0 0.0
    %267 = vmatprep.subr.mxu0 0.0
    %268 = vmatpush1.msra.mxu0 0.0
    %269 = vmatprep.subr.mxu0 0.0
    %270 = vmatpush1.msra.mxu0 0.0
    %271 = vmatprep.subr.mxu0 0.0
    %272 = vmatpush1.msra.mxu0 0.0
    %273 = vmatprep.subr.mxu0 0.0
    %274 = vmatpush1.msra.mxu0 0.0
    %275 = vmatprep.subr.mxu0 0.0
    %276 = vmatpush1.msra.mxu0 0.0
    %277 = vmatprep.subr.mxu0 0.0
    %278 = vmatpush1.msra.mxu0 0.0
    %279 = vmatprep.subr.mxu0 0.0
    %280 = vmatpush1.msra.mxu0 0.0
    %281 = vmatprep.subr.mxu0 0.0
    %282 = vmatpush1.msra.mxu0 0.0
    %283 = vmatprep.subr.mxu0 0.0
    %284 = vmatpush1.msra.mxu0 0.0
    %285 = vmatprep.subr.mxu0 0.0
    %286 = vmatpush1.msra.mxu0 0.0
    %287 = vmatprep.subr.mxu0 0.0
    %288 = vmatpush1.msra.mxu0 0.0
    %289 = vmatprep.subr.mxu0 0.0
    %290 = vmatpush1.msra.mxu0 0.0
    %291 = vmatprep.subr.mxu0 0.0
    %292 = vmatpush1.msra.mxu0 0.0
    %293 = vmatprep.subr.mxu0 0.0
    %294 = vmatpush1.msra.mxu0 0.0
    %295 = vmatprep.subr.mxu0 0.0
    %296 = vmatpush1.msra.mxu0 0.0
    %297 = vmatprep.subr.mxu0 0.0
    %298 = vmatpush1.msra.mxu0 0.0
    %299 = vmatprep.subr.mxu0 0.0
    %300 = vmatpush1.msra.mxu0 0.0
    %301 = vmatprep.subr.mxu0 0.0
    %302 = vmatpush1.msra.mxu0 0.0
    %303 = vmatprep.mubr.f32.mxu0 0.0
    %304 = vmatmul.mubr.f32.gmra.mrb[0].mxu0 %v234
    %v305 = vpop.f32.mrb[0].mxu0
    %v306 = vadd.f32 %v230, %v305
    %v307 = vpop.f32.mrb[0].mxu0
    %308 = vmatprep.mubr.f32.mxu0 0.0
    %309 = vmatmul.mubr.f32.gmra.mrb[0].mxu0 %v237
    %v310 = vpop.f32.mrb[0].mxu0
    %v311 = vadd.f32 %v230, %v310
    %v312 = vpop.f32.mrb[0].mxu0
    %313 = vdwg.mxu0
    %314 = vst.msk [vmem:[#allocation2] sm:$0xff] %vm133, %v306
    %315 = vst.msk [vmem:[#allocation2 + $0x8] sm:$0xff] %vm133, %v311
    // Predicated region
    $region30: #{tpu_custom_call.1} parent=1 // pred_check
      _
    $region31: #{tpu_custom_call.1} parent=1 // pred_check_branch
      %317 = sbr.rel (0) target = $region33
    $region32: #{tpu_custom_call.1} parent=1 // pred_region
      %s319 = ssub.s32 256, 256
      %320 = vsyncadd [#allocation3], %s319
      %s321 = sshll.u32 [#allocation2], 4
      %s322 = int_to_ptr.vmem [resolvable:$true] %s321
      %327 = dma.vmem_to_hbm [thread:$0]  %s322, 256, %s7, [#allocation3], 128, 128, 8
    $region33: #{tpu_custom_call.1} parent=1 // pred_fallthru
      _
    // Predicated region
    $region34: #{tpu_custom_call.1} parent=1 // pred_check
      _
    $region35: #{tpu_custom_call.1} parent=1 // pred_check_branch
      %329 = sbr.rel (0) target = $region37
    $region36: #{tpu_custom_call.1} parent=1 // pred_region
      %330 = dma.done [#allocation3], 256
    $region37: #{tpu_custom_call.1} parent=1 // pred_fallthru
      _
    %331 = vsyncpa [#allocation3], 1

</llo_original>
